<compile_context>
chip_gen: v5e
topology: v5e:2x2
jax: 0.10.0
libtpu: 0.0.40
codegen_flags: <defaults>
</compile_context>

<pallas_src>
import jax
import jax.numpy as jnp
from jax.experimental import pallas as pl
from jax.experimental.pallas import tpu as pltpu


def _round_up(n, m):
    return ((n + m - 1) // m) * m


def _dynamics_kernel(xu_ref, w_ref, o_ref):
    # Single fused MXU matmul with f32 accumulation:  out = [x | u] @ W
    o_ref[...] = jnp.dot(
        xu_ref[...], w_ref[...], preferred_element_type=jnp.float32
    ).astype(o_ref.dtype)


def fused_weight(A, B):
    """Build the fused, padded weight W = [[A^T], [B^T]] once.

    A: (dim_x, dim_x), B: (dim_x, dim_u)
    returns W_pad: (k_pad, n_pad) with k_pad = round_up(dim_x+dim_u, 8),
                                        n_pad = round_up(dim_x, 128).
    """
    dim_x = A.shape[0]
    dim_u = B.shape[1]
    k = dim_x + dim_u
    k_pad = _round_up(k, 8)
    n_pad = _round_up(dim_x, 128)
    W = jnp.concatenate([A.T, B.T], axis=0).astype(jnp.float32)  # (k, dim_x)
    return jnp.pad(W, ((0, k_pad - k), (0, n_pad - dim_x)))


def dynamics_batch_packed(x, u, W_pad, dim_x):
    """xnext = x @ A^T + u @ B^T via one fused matmul with a prebuilt W_pad.

    x: (batch, dim_x), u: (batch, dim_u), W_pad: (k_pad, n_pad) from
    fused_weight(). Returns (batch, dim_x).
    """
    batch = x.shape[0]
    k = x.shape[1] + u.shape[1]
    k_pad, n_pad = W_pad.shape

    # Batch tile: multiple of 8 sublanes, capped at 512 f32 rows.
    tb = min(512, _round_up(batch, 8))
    batch_pad = _round_up(batch, tb)

    # Concatenate + zero-pad inputs (outside the kernel; fused by XLA).
    xu = jnp.concatenate([x, u], axis=1).astype(jnp.float32)
    xu = jnp.pad(xu, ((0, batch_pad - batch), (0, k_pad - k)))

    grid = (batch_pad // tb,)
    bytes_accessed = 4 * (batch_pad * k_pad + k_pad * n_pad + batch_pad * n_pad)

    out = pl.pallas_call(
        _dynamics_kernel,
        out_shape=jax.ShapeDtypeStruct((batch_pad, n_pad), jnp.float32),
        grid_spec=pltpu.PrefetchScalarGridSpec(
            num_scalar_prefetch=0,
            grid=grid,
            in_specs=[
                # Activations: tiled over batch (double-buffered pipeline).
                pl.BlockSpec((tb, k_pad), lambda i: (i, 0)),
                # Fused weight: same block every step -> stays VMEM-resident.
                pl.BlockSpec((k_pad, n_pad), lambda i: (0, 0)),
            ],
            out_specs=pl.BlockSpec((tb, n_pad), lambda i: (i, 0)),
        ),
        compiler_params=pltpu.CompilerParams(
            dimension_semantics=("parallel",),
        ),
        cost_estimate=pl.CostEstimate(
            flops=2 * batch_pad * k_pad * n_pad,
            transcendentals=0,
            bytes_accessed=bytes_accessed,
        ),
    )(xu, W_pad)

    # Strip batch + lane padding.
    return out[:batch, :dim_x]


def dynamics_batch(x, u, A, B):
    """Convenience path when only (A, B) are at hand (builds W_pad on the fly)."""
    return dynamics_batch_packed(x, u, fused_weight(A, B), A.shape[0])


def dynamics(x, u, A, B):
    """Single-sample version: mirrors DynamicalSystem.dynamics (unsqueeze/squeeze)."""
    return dynamics_batch(x[None, :], u[None, :], A, B)[0]


class DynamicalSystemPallas:
    """Pallas-backed concrete DynamicalSystem: xnext = A x + B u."""

    def __init__(self, dim_x, dim_u, key):
        self.dim_x = dim_x
        self.dim_u = dim_u
        self.is_differentiable = False
        ka, kb = jax.random.split(key)
        # Deterministic synthetic parameters.
        self.A = jax.random.normal(ka, (dim_x, dim_x), dtype=jnp.float32) * 0.1
        self.B = jax.random.normal(kb, (dim_x, dim_u), dtype=jnp.float32) * 0.1
        # One-time fused + padded weight (transpose / concat hoisted here).
        self.W_pad = fused_weight(self.A, self.B)

    def dynamics_batch(self, x, u):
        return dynamics_batch_packed(x, u, self.W_pad, self.dim_x)

    def dynamics(self, x, u):
        return self.dynamics_batch(x[None, :], u[None, :])[0]

    def forward(self, x, u):
        return self.dynamics_batch(x, u)

    __call__ = forward


if __name__ == "__main__":
    key = jax.random.PRNGKey(0)
    k_sys, k_x, k_u, k_x2, k_u2 = jax.random.split(key, 5)

    batch, dim_x, dim_u = 8, 32, 8
    sys = DynamicalSystemPallas(dim_x, dim_u, k_sys)

    x = jax.random.normal(k_x, (batch, dim_x), dtype=jnp.float32)
    u = jax.random.normal(k_u, (batch, dim_u), dtype=jnp.float32)

    xnext = sys(x, u)
    jax.block_until_ready(xnext)

    # Reference check in plain JAX.
    ref = x @ sys.A.T + u @ sys.B.T
    assert xnext.shape == (batch, dim_x)
    assert jnp.allclose(xnext, ref, atol=1e-5, rtol=1e-5)

    # Single-sample path (DynamicalSystem.dynamics semantics).
    xn1 = sys.dynamics(x[0], u[0])
    jax.block_until_ready(xn1)
    assert xn1.shape == (dim_x,)
    assert jnp.allclose(xn1, ref[0], atol=1e-5, rtol=1e-5)

    # Multi-tile + ragged-batch path (batch not a multiple of the 512-row tile).
    batch2 = 1030
    x2 = jax.random.normal(k_x2, (batch2, dim_x), dtype=jnp.float32)
    u2 = jax.random.normal(k_u2, (batch2, dim_u), dtype=jnp.float32)
    xnext2 = sys(x2, u2)
    jax.block_until_ready(xnext2)
    ref2 = x2 @ sys.A.T + u2 @ sys.B.T
    assert xnext2.shape == (batch2, dim_x)
    assert jnp.allclose(xnext2, ref2, atol=1e-5, rtol=1e-5)

    print("KERNEL_OK")
</pallas_src>

<mosaic_0001>
module attributes {stable_mosaic.version = 11 : i64} {
  func.func @_dynamics_kernel(%arg0: i32, %arg1: memref<8x40xf32, #tpu.memory_space<vmem>>, %arg2: memref<40x128xf32, #tpu.memory_space<vmem>>, %arg3: memref<8x128xf32, #tpu.memory_space<vmem>>) attributes {dimension_semantics = [#tpu.dimension_semantics<parallel>], iteration_bounds = array<i64: 1>, scalar_prefetch = 0 : i64, scratch_operands = 0 : i64, tpu.core_type = #tpu.core_type<tc>, window_params = [{transform_indices = @transform_0, window_bounds = array<i64: 8, 40>}, {pipeline_mode = #tpu.pipeline_mode<synchronous>, transform_indices = @transform_1, window_bounds = array<i64: 40, 128>}, {transform_indices = @transform_2, window_bounds = array<i64: 8, 128>}]} {
    %c0 = arith.constant 0 : index
    %c0_0 = arith.constant 0 : index
    %0 = vector.load %arg1[%c0, %c0_0] : memref<8x40xf32, #tpu.memory_space<vmem>>, vector<8x40xf32>
    %c0_1 = arith.constant 0 : index
    %c0_2 = arith.constant 0 : index
    %1 = vector.load %arg2[%c0_1, %c0_2] : memref<40x128xf32, #tpu.memory_space<vmem>>, vector<40x128xf32>
    %cst = arith.constant dense<0.000000e+00> : vector<8x128xf32>
    %2 = tpu.matmul %0, %1, %cst {dimension_numbers = #tpu.dot_dimension_numbers<[1], [0], [0], [1], [0, 0, 1, 1], [], []>} : vector<8x40xf32>, vector<40x128xf32>, vector<8x128xf32> -> vector<8x128xf32>
    %c0_3 = arith.constant 0 : index
    %c0_4 = arith.constant 0 : index
    %3 = vector.load %arg3[%c0_3, %c0_4] : memref<8x128xf32, #tpu.memory_space<vmem>>, vector<8x128xf32>
    tpu.vector_store %arg3[%c0_3, %c0_4], %2 {strides = array<i32>} : memref<8x128xf32, #tpu.memory_space<vmem>>, vector<8x128xf32>,
    return
  }
  func.func @transform_0(%arg0: i32) -> (i32, i32) {
    %c0_i32 = arith.constant 0 : i32
    %c0_i32_0 = arith.constant 0 : i32
    return %arg0, %c0_i32 : i32, i32
  }
  func.func @transform_1(%arg0: i32) -> (i32, i32) {
    %c0_i32 = arith.constant 0 : i32
    %c0_i32_0 = arith.constant 0 : i32
    %c0_i32_1 = arith.constant 0 : i32
    return %c0_i32, %c0_i32_0 : i32, i32
  }
  func.func @transform_2(%arg0: i32) -> (i32, i32) {
    %c0_i32 = arith.constant 0 : i32
    %c0_i32_0 = arith.constant 0 : i32
    return %arg0, %c0_i32 : i32, i32
  }
}

</mosaic_0001>

<llo_original>
// kernel: tpu_custom_call.1
$region0: #{tpu_custom_call.1}
  #allocation0 [shape = 'u32[]', space=smem, size = 0x4, offset = 0x4, fixed_abs, tag = 'smem constant byte address 0x4 - core index']
  #allocation1 [shape = 'u32[72,128]{1,0:T(1,128)}', space=vmem, size = 0x9000, scoped, tag = 'internal scratch']
  %s0 = inlined_call_operand.hbm [shape: f32[8,40], index: 0, kind: input, shape index: {}]
  %s1 = inlined_call_operand.hbm [shape: f32[40,128], index: 1, kind: input, shape index: {}]
  %s2 = inlined_call_operand.hbm [shape: f32[8,128], index: 2, kind: output, shape index: {}]
  %s3 = sld [smem:[#allocation0]]
  $region26: #{tpu_custom_call.1} parent=0
    _
  %s5 = ssub.s32 1, %s3
  %s6 = scalar_select 0, %s5, %s3
  $region1: #{tpu_custom_call.1} parent=0
    #allocation2 [shape = 'u8[4096]{0}', space=vmem, size = 0x1000, scoped, tag = 'input window, operand 0, single buffered']
    #allocation3 [shape = 's32[1]{0}', space=sflag, size = 0x4, scoped, tag = 'scoped memory for tpu_custom_call.1']
    #allocation4 [shape = 's32[1]{0}', space=sflag, size = 0x4, scoped, tag = 'scoped memory for tpu_custom_call.1']
    #allocation5 [shape = 'u8[20480]{0}', space=vmem, size = 0x5000, scoped, tag = 'input window, operand 1, single buffered']
    #allocation6 [shape = 's32[1]{0}', space=sflag, size = 0x4, scoped, tag = 'scoped memory for tpu_custom_call.1']
    #allocation7 [shape = 'u8[4096]{0}', space=vmem, size = 0x1000, scoped, tag = 'output window, operand 0, single buffered']
    %7 = vsyncpa [#allocation3], 0
    %8 = vsyncpa [#allocation6], 0
    %9 = vsyncpa [#allocation4], 0
    // Predicated region
    $region2: #{tpu_custom_call.1} parent=1 // pred_check
      _
    $region3: #{tpu_custom_call.1} parent=1 // pred_check_branch
      %11 = sbr.rel (0) target = $region5
    $region4: #{tpu_custom_call.1} parent=1 // pred_region
      %13 = vsyncadd [#allocation3], 0
      %s15 = sshll.u32 %s0, 4
      %s16 = int_to_ptr.hbm [resolvable:$true] %s15
      %s17 = sshll.u32 [#allocation2], 4
      %s18 = int_to_ptr.vmem [resolvable:$true] %s17
      %20 = dma.hbm_to_vmem [thread:$0]  %s16, 128, %s18, [#allocation3]
    $region5: #{tpu_custom_call.1} parent=1 // pred_fallthru
      _
    // Predicated region
    $region6: #{tpu_custom_call.1} parent=1 // pred_check
      _
    $region7: #{tpu_custom_call.1} parent=1 // pred_check_branch
      %22 = sbr.rel (0) target = $region9
    $region8: #{tpu_custom_call.1} parent=1 // pred_region
      %24 = vsyncadd [#allocation6], 0
      %s25 = sshll.u32 %s1, 4
      %s26 = int_to_ptr.hbm [resolvable:$true] %s25
      %s27 = sshll.u32 [#allocation5], 4
      %s28 = int_to_ptr.vmem [resolvable:$true] %s27
      %33 = dma.hbm_to_vmem [thread:$0]  %s26, 640, %s28, [#allocation6], 128, 128, 8
    $region9: #{tpu_custom_call.1} parent=1 // pred_fallthru
      _
    // Predicated region
    $region10: #{tpu_custom_call.1} parent=1 // pred_check
      _
    $region11: #{tpu_custom_call.1} parent=1 // pred_check_branch
      %35 = sbr.rel (0) target = $region13
    $region12: #{tpu_custom_call.1} parent=1 // pred_region
      %37 = dma.done [#allocation3], 128
    $region13: #{tpu_custom_call.1} parent=1 // pred_fallthru
      _
    // Predicated region
    $region14: #{tpu_custom_call.1} parent=1 // pred_check
      _
    $region15: #{tpu_custom_call.1} parent=1 // pred_check_branch
      %39 = sbr.rel (0) target = $region17
    $region16: #{tpu_custom_call.1} parent=1 // pred_region
      %41 = dma.done [#allocation6], 640
    $region17: #{tpu_custom_call.1} parent=1 // pred_fallthru
      _
    %v42 = vld [vmem:[#allocation2] sm:$0xff]
    %v43 = vld [vmem:[#allocation5] sm:$0xff]
    %v44 = vld [vmem:[#allocation5 + $0x8] sm:$0xff]
    %v45 = vld [vmem:[#allocation5 + $0x10] sm:$0xff]
    %v46 = vld [vmem:[#allocation5 + $0x18] sm:$0xff]
    %v47 = vld [vmem:[#allocation5 + $0x20] sm:$0xff]
    %vm48 = vcmask 326656
    %v50 = vsel %vm48, %v42, 0
    %52 = vmatpush.msra.mxu0 0.0
    %53 = vmatpush.msra.mxu0 0.0
    %54 = vmatpush.msra.mxu0 0.0
    %55 = vmatpush.msra.mxu0 0.0
    %56 = vmatpush.msra.mxu0 0.0
    %57 = vmatpush.msra.mxu0 0.0
    %58 = vmatpush.msra.mxu0 0.0
    %59 = vmatpush.msra.mxu0 0.0
    %60 = vmatpush.msra.mxu0 0.0
    %61 = vmatpush.msra.mxu0 0.0
    %62 = vmatpush.msra.mxu0 0.0
    %63 = vmatpush.msra.mxu0 %v47
    %64 = vmatpush.msra.mxu0 %v46
    %65 = vmatpush.msra.mxu0 %v45
    %66 = vmatpush.msra.mxu0 %v44
    %67 = vmatpush.msra.mxu0 %v43
    %68 = vmatmul.f32.gmra.mxu0 %v50
    %v69 = vpop.f32.mrf.mxu0
    %v70 = vadd.f32 0.0, %v69
    %71 = vdwg.mxu0
    %72 = vst [vmem:[#allocation7] sm:$0xff] %v70
    // Predicated region
    $region18: #{tpu_custom_call.1} parent=1 // pred_check
      _
    $region19: #{tpu_custom_call.1} parent=1 // pred_check_branch
      %74 = sbr.rel (0) target = $region21
    $region20: #{tpu_custom_call.1} parent=1 // pred_region
      %76 = vsyncadd [#allocation4], 0
      %s78 = sshll.u32 [#allocation7], 4
      %s79 = int_to_ptr.vmem [resolvable:$true] %s78
      %s80 = sshll.u32 %s2, 4
      %s81 = int_to_ptr.hbm [resolvable:$true] %s80
      %83 = dma.vmem_to_hbm [thread:$0]  %s79, 128, %s81, [#allocation4]
    $region21: #{tpu_custom_call.1} parent=1 // pred_fallthru
      _
    // Predicated region
    $region22: #{tpu_custom_call.1} parent=1 // pred_check
      _
    $region23: #{tpu_custom_call.1} parent=1 // pred_check_branch
      %85 = sbr.rel (0) target = $region25
    $region24: #{tpu_custom_call.1} parent=1 // pred_region
      %87 = dma.done [#allocation4], 128
    $region25: #{tpu_custom_call.1} parent=1 // pred_fallthru
      _
    %88 = vsyncpa [#allocation3], 1
    %89 = vsyncpa [#allocation6], 1
    %90 = vsyncpa [#allocation4], 1

</llo_original>
